<compile_context>
chip_gen: v5e
topology: v5e:2x2
jax: 0.10.0
libtpu: 0.0.40
codegen_flags: <defaults>
</compile_context>

<pallas_src>
import numpy as np
import jax
import jax.numpy as jnp
from jax import lax
from jax.experimental import pallas as pl
from jax.experimental.pallas import tpu as pltpu

H = W = 16
HW = H * W          # 256 memory elements / pixels per frame
CK = 32             # key feature dim
CV = 32             # value feature dim
NPAD = 128          # lane-padded object-logit dim (only the first num_objects+1 used)
TQ = 384            # query rows per grid step (grid=(2,): one step per TC on v7x)
SUB = 128           # rows per inner softmax/PV sub-tile (32 f32 vregs live -> no spill)


# ----------------------- Kernel A: prepare_mask ----------------------------
# Per-pixel: RGB packed on host as r*255*255 + g*255 + b (mirrors the original
# reference exactly, including the non-injective base-255 packing), then each
# unique packed color is sequentially mapped to its index (exactly mirroring the
# numpy loop `mskk[mskk == val] = idx`). Elementwise VPU work, lane-dense (2,128).
def _make_mask_kernel(num_colors):
    def mask_kernel(colors_ref, packed_ref, out_ref):
        mskk = packed_ref[...]
        for idx in range(num_colors):                 # static, tiny
            mskk = jnp.where(mskk == colors_ref[idx], idx, mskk)
        out_ref[...] = mskk                           # int32 (uint8-valued)
    return mask_kernel


def prepare_mask_pallas(mask_np):
    msk = mask_np.astype(np.int64)
    packed_np = msk[:, :, 0] * 255 * 255 + msk[:, :, 1] * 255 + msk[:, :, 2]
    colors = np.unique(packed_np)                     # host glue (np.unique, as in original)
    nc = int(len(colors))

    rows, lanes = HW // 128, 128                      # lane-dense layout
    packed = jnp.asarray(packed_np.astype(np.int32).reshape(rows, lanes))
    colors_j = jnp.asarray(colors, jnp.int32)

    spec = pl.BlockSpec((rows, lanes), lambda i, colors: (0, 0))
    out = pl.pallas_call(
        _make_mask_kernel(nc),
        out_shape=jax.ShapeDtypeStruct((rows, lanes), jnp.int32),
        grid_spec=pltpu.PrefetchScalarGridSpec(
            num_scalar_prefetch=1,               # colors -> SMEM
            grid=(1,),
            in_specs=[spec],
            out_specs=spec,
        ),
    )(colors_j, packed)
    return out.reshape(H, W), colors


# ------------------ Kernel B: XMem memory readout --------------------------
# Grid over 384-row query tiles (frames are flattened into the row axis).
# q is pre-scaled by 2/sqrt(CK); mk_T is the pre-transposed [CK, HW] key matrix;
# mksq is ||mk||^2/sqrt(CK) (from the bf16-rounded mk); mv_dec = mv @ w_dec.
# All matmul operands are bf16; accumulation is f32.
def readout_kernel(q_ref, mkT_ref, mksq_ref, mvdec_ref, out_ref):
    mkT = mkT_ref[...]                                 # [CK, HW]   bf16 (stationary)
    mksq = mksq_ref[...]                               # [1, HW]    f32
    mvdec = mvdec_ref[...]                             # [HW, NPAD] bf16

    def body(t, carry):
        r0 = pl.multiple_of(t * SUB, SUB)
        q = q_ref[pl.ds(r0, SUB), :]                   # [SUB, CK] bf16 (pre-scaled)

        # XMem L2 similarity: (2 * q.mk^T - ||mk||^2) / sqrt(CK), scales folded in.
        sim = jnp.dot(q, mkT, preferred_element_type=jnp.float32)   # [SUB, HW] f32
        sim = sim - mksq                               # broadcast [1, HW]

        # softmax over the memory axis (normalization deferred through the matmul)
        # TODO(synk): XMem applies top_k=30 pruning before the softmax; full softmax used here.
        m = jnp.max(sim, axis=-1, keepdims=True)
        p = jnp.exp((sim - m).astype(jnp.bfloat16))    # bf16 EUP exp
        denom = jnp.sum(p, axis=-1, keepdims=True, dtype=jnp.float32)

        logits = jnp.dot(p, mvdec, preferred_element_type=jnp.float32)  # [SUB, NPAD]
        out_ref[pl.ds(r0, SUB), :] = (
            logits * pl.reciprocal(denom, approx=True)).astype(out_ref.dtype)
        return carry

    lax.fori_loop(0, TQ // SUB, body, 0, unroll=True)  # short fixed trip count


def memory_readout(q_all_flat, mk_T, mk_sq, mv_dec):
    tot = q_all_flat.shape[0]                          # T*HW rows
    grid = (tot // TQ,)
    return pl.pallas_call(
        readout_kernel,
        out_shape=jax.ShapeDtypeStruct((tot, NPAD), jnp.bfloat16),   # bf16 writeback
        grid_spec=pltpu.PrefetchScalarGridSpec(
            num_scalar_prefetch=0,
            grid=grid,
            in_specs=[
                pl.BlockSpec((TQ, CK), lambda i: (i, 0)),    # query tile
                pl.BlockSpec((CK, HW), lambda i: (0, 0)),    # memory keys^T (grid-invariant)
                pl.BlockSpec((1, HW), lambda i: (0, 0)),     # ||mk||^2 / sqrt(CK)
                pl.BlockSpec((HW, NPAD), lambda i: (0, 0)),  # mv @ w_dec
            ],
            out_specs=pl.BlockSpec((TQ, NPAD), lambda i: (i, 0)),
        ),
        compiler_params=pltpu.CompilerParams(
            dimension_semantics=("parallel",)),
    )(q_all_flat, mk_T, mk_sq, mv_dec)


if __name__ == "__main__":
    key = jax.random.PRNGKey(0)
    T = 3
    k_frames, k_wqk, k_wval, k_wdec = jax.random.split(key, 4)

    # Synthetic video frames and a first-frame RGB mask with 2 objects + background.
    frames = np.asarray(
        jax.random.randint(k_frames, (T, H, W, 3), 0, 256, dtype=jnp.int32),
        dtype=np.uint8)
    first_mask = np.zeros((H, W, 3), dtype=np.uint8)
    first_mask[2:8, 2:8] = np.array([255, 0, 0], np.uint8)     # object 1
    first_mask[9:14, 9:14] = np.array([0, 255, 0], np.uint8)   # object 2

    # --- prepare_mask (Pallas kernel A) ---
    mask_idx, colors = prepare_mask_pallas(first_mask)
    mask_idx = jax.block_until_ready(mask_idx)
    num_objects = len(np.unique(np.asarray(mask_idx))) - 1
    n_cls = num_objects + 1

    # index_numpy_to_one_hot_torch equivalent (glue)
    onehot = jax.nn.one_hot(jnp.asarray(mask_idx).reshape(HW), n_cls, dtype=jnp.float32)

    # image_to_torch equivalent: uint8 -> float in [0,1] (glue)
    frames_f = jnp.asarray(frames, jnp.float32) / 255.0
    frames_flat = frames_f.reshape(T, HW, 3)

    # Deterministic synthetic stand-ins for the XMem key encoder, value encoder
    # and decoder projections (the real checkpoint is not loadable here).
    w_qk = jax.random.normal(k_wqk, (3, CK), jnp.float32) * 0.5
    w_val = jax.random.normal(k_wval, (3 + n_cls, CV), jnp.float32) * 0.5
    w_dec = jax.random.normal(k_wdec, (CV, NPAD), jnp.float32) * 0.5

    # Query keys for every frame; memory key/value from frame 0 (+ its mask).
    # mem_every=5 with T<5 frames => only frame 0 is memorized.
    scale = 1.0 / np.sqrt(CK)
    q_all = (frames_flat @ w_qk).reshape(T * HW, CK)                       # [T*HW, CK] f32
    q_all = (q_all * (2.0 * scale)).astype(jnp.bfloat16)                   # fold 2/sqrt(CK)
    mk_bf = (frames_flat[0] @ w_qk).astype(jnp.bfloat16)                   # [HW, CK] bf16
    mk_T = jnp.transpose(mk_bf)                                            # [CK, HW] stationary
    mk_f32 = mk_bf.astype(jnp.float32)                                     # consistent with bf16 dot
    mk_sq = (jnp.sum(mk_f32 * mk_f32, axis=-1) * scale).reshape(1, HW)     # [1, HW] f32
    mv = jnp.concatenate([frames_flat[0], onehot], axis=1) @ w_val         # [HW, CV] f32
    mv_dec = (mv @ w_dec).astype(jnp.bfloat16)                             # [HW, NPAD]

    # --- memory attention readout (Pallas kernel B) ---
    logits = memory_readout(q_all, mk_T, mk_sq, mv_dec)                    # [T*HW, NPAD] bf16
    logits = jax.block_until_ready(logits)

    # torch_prob_to_numpy_mask equivalent: argmax over object channels (glue)
    preds = np.array(jnp.argmax(logits[:, :n_cls], axis=-1)).reshape(T, H, W)
    # Frame 0 is stepped WITH the provided mask, so its prediction is that mask.
    preds[0] = np.asarray(mask_idx)
    predictions = [preds[t].astype(np.uint8) for t in range(T)]

    assert len(predictions) == T and predictions[0].shape == (H, W)
    print("KERNEL_OK")
</pallas_src>

<mosaic_0001>
module attributes {stable_mosaic.version = 11 : i64} {
  func.func @mask_kernel(%arg0: i32, %arg1: memref<3xi32, #tpu.memory_space<smem>>, %arg2: memref<2x128xi32, #tpu.memory_space<vmem>>, %arg3: memref<2x128xi32, #tpu.memory_space<vmem>>) attributes {dimension_semantics = [#tpu.dimension_semantics<arbitrary>], iteration_bounds = array<i64: 1>, scalar_prefetch = 1 : i64, scratch_operands = 0 : i64, tpu.core_type = #tpu.core_type<tc>, window_params = [{pipeline_mode = #tpu.pipeline_mode<synchronous>, transform_indices = @transform_0, window_bounds = array<i64: 2, 128>}, {pipeline_mode = #tpu.pipeline_mode<synchronous>, transform_indices = @transform_1, window_bounds = array<i64: 2, 128>}]} {
    %c0 = arith.constant 0 : index
    %c0_0 = arith.constant 0 : index
    %0 = vector.load %arg2[%c0, %c0_0] : memref<2x128xi32, #tpu.memory_space<vmem>>, vector<2x128xi32>
    %c0_1 = arith.constant 0 : index
    %1 = memref.load %arg1[%c0_1] : memref<3xi32, #tpu.memory_space<smem>>
    %2 = vector.broadcast %1 : i32 to vector<2x128xi32>
    %3 = arith.cmpi eq, %0, %2 : vector<2x128xi32>
    %c0_i32 = arith.constant 0 : i32
    %4 = vector.broadcast %c0_i32 : i32 to vector<2x128xi32>
    %5 = arith.select %3, %4, %0 : vector<2x128xi1>, vector<2x128xi32>
    %c1 = arith.constant 1 : index
    %6 = memref.load %arg1[%c1] : memref<3xi32, #tpu.memory_space<smem>>
    %7 = vector.broadcast %6 : i32 to vector<2x128xi32>
    %8 = arith.cmpi eq, %5, %7 : vector<2x128xi32>
    %c1_i32 = arith.constant 1 : i32
    %9 = vector.broadcast %c1_i32 : i32 to vector<2x128xi32>
    %10 = arith.select %8, %9, %5 : vector<2x128xi1>, vector<2x128xi32>
    %c2 = arith.constant 2 : index
    %11 = memref.load %arg1[%c2] : memref<3xi32, #tpu.memory_space<smem>>
    %12 = vector.broadcast %11 : i32 to vector<2x128xi32>
    %13 = arith.cmpi eq, %10, %12 : vector<2x128xi32>
    %c2_i32 = arith.constant 2 : i32
    %14 = vector.broadcast %c2_i32 : i32 to vector<2x128xi32>
    %15 = arith.select %13, %14, %10 : vector<2x128xi1>, vector<2x128xi32>
    %c0_2 = arith.constant 0 : index
    %c0_3 = arith.constant 0 : index
    %16 = vector.load %arg3[%c0_2, %c0_3] : memref<2x128xi32, #tpu.memory_space<vmem>>, vector<2x128xi32>
    tpu.vector_store %arg3[%c0_2, %c0_3], %15 {strides = array<i32>} : memref<2x128xi32, #tpu.memory_space<vmem>>, vector<2x128xi32>,
    return
  }
  func.func @transform_0(%arg0: i32, %arg1: memref<3xi32, #tpu.memory_space<smem>>) -> (i32, i32) {
    %c0_i32 = arith.constant 0 : i32
    %c0_i32_0 = arith.constant 0 : i32
    %c0_i32_1 = arith.constant 0 : i32
    return %c0_i32, %c0_i32_0 : i32, i32
  }
  func.func @transform_1(%arg0: i32, %arg1: memref<3xi32, #tpu.memory_space<smem>>) -> (i32, i32) {
    %c0_i32 = arith.constant 0 : i32
    %c0_i32_0 = arith.constant 0 : i32
    %c0_i32_1 = arith.constant 0 : i32
    return %c0_i32, %c0_i32_0 : i32, i32
  }
}

</mosaic_0001>

<llo_original>
// kernel: tpu_custom_call.1
$region0: #{tpu_custom_call.1}
  #allocation0 [shape = 'u32[]', space=smem, size = 0x4, offset = 0x4, fixed_abs, tag = 'smem constant byte address 0x4 - core index']
  #allocation1 [shape = 'u32[72,128]{1,0:T(1,128)}', space=vmem, size = 0x9000, scoped, tag = 'internal scratch']
  #allocation2 [shape = 's32[1]{0}', space=sflag, size = 0x4, scoped, tag = 'scoped memory for tpu_custom_call.1']
  #allocation3 [shape = 'u8[512]{0}', space=smem, size = 0x200, scoped, tag = 'prefetched SMEM operand 0']
  %s0 = inlined_call_operand.hbm [shape: s32[3], index: 0, kind: input, shape index: {}]
  %s1 = inlined_call_operand.hbm [shape: s32[2,128], index: 1, kind: input, shape index: {}]
  %s2 = inlined_call_operand.hbm [shape: s32[2,128], index: 2, kind: output, shape index: {}]
  %s3 = sld [smem:[#allocation0]]
  $region18: #{tpu_custom_call.1} parent=0
    _
  %s5 = ssub.s32 1, %s3
  %s6 = scalar_select 0, %s5, %s3
  %s8 = sshll.u32 %s0, 4
  %s9 = int_to_ptr.hbm [resolvable:$true] %s8
  %11 = dma.hbm_to_smem %s9, 16, [#allocation3], [#allocation2]
  %13 = dma.done [#allocation2], 16
  %14 = sfence
  $region1: #{tpu_custom_call.1} parent=0
    #allocation4 [shape = 'u8[1024]{0}', space=vmem, size = 0x400, scoped, tag = 'input window, operand 1, single buffered']
    #allocation5 [shape = 's32[1]{0}', space=sflag, size = 0x4, scoped, tag = 'scoped memory for tpu_custom_call.1']
    #allocation6 [shape = 's32[1]{0}', space=sflag, size = 0x4, scoped, tag = 'scoped memory for tpu_custom_call.1']
    #allocation7 [shape = 'u8[1024]{0}', space=vmem, size = 0x400, scoped, tag = 'output window, operand 0, single buffered']
    %15 = vsyncpa [#allocation5], 0
    %16 = vsyncpa [#allocation6], 0
    // Predicated region
    $region2: #{tpu_custom_call.1} parent=1 // pred_check
      _
    $region3: #{tpu_custom_call.1} parent=1 // pred_check_branch
      %18 = sbr.rel (0) target = $region5
    $region4: #{tpu_custom_call.1} parent=1 // pred_region
      %20 = vsyncadd [#allocation5], 0
      %s22 = sshll.u32 %s1, 4
      %s23 = int_to_ptr.hbm [resolvable:$true] %s22
      %s24 = sshll.u32 [#allocation4], 4
      %s25 = int_to_ptr.vmem [resolvable:$true] %s24
      %27 = dma.hbm_to_vmem [thread:$0]  %s23, 32, %s25, [#allocation5]
    $region5: #{tpu_custom_call.1} parent=1 // pred_fallthru
      _
    // Predicated region
    $region6: #{tpu_custom_call.1} parent=1 // pred_check
      _
    $region7: #{tpu_custom_call.1} parent=1 // pred_check_branch
      %29 = sbr.rel (0) target = $region9
    $region8: #{tpu_custom_call.1} parent=1 // pred_region
      %31 = dma.done [#allocation5], 32
    $region9: #{tpu_custom_call.1} parent=1 // pred_fallthru
      _
    %v32 = vld [vmem:[#allocation4] sm:$0x3]
    %s33 = sld [smem:[#allocation3]]
    %v34 = vstv %s33
    %vm35 = vcmp.eq.s32.totalorder %v32, %v34
    %v36 = vsel %vm35, 0, %v32
    %s37 = sld [smem:[#allocation3 + $0x1]]
    %v38 = vstv %s37
    %vm39 = vcmp.eq.s32.totalorder %v36, %v38
    %v40 = vsel %vm39, 1, %v36
    %s41 = sld [smem:[#allocation3 + $0x2]]
    %v42 = vstv %s41
    %vm43 = vcmp.eq.s32.totalorder %v40, %v42
    %v44 = vsel %vm43, 2, %v40
    %45 = vst [vmem:[#allocation7] sm:$0x3] %v44
    // Predicated region
    $region10: #{tpu_custom_call.1} parent=1 // pred_check
      _
    $region11: #{tpu_custom_call.1} parent=1 // pred_check_branch
      %47 = sbr.rel (0) target = $region13
    $region12: #{tpu_custom_call.1} parent=1 // pred_region
      %49 = vsyncadd [#allocation6], 0
      %s51 = sshll.u32 [#allocation7], 4
      %s52 = int_to_ptr.vmem [resolvable:$true] %s51
      %s53 = sshll.u32 %s2, 4
      %s54 = int_to_ptr.hbm [resolvable:$true] %s53
      %56 = dma.vmem_to_hbm [thread:$0]  %s52, 32, %s54, [#allocation6]
    $region13: #{tpu_custom_call.1} parent=1 // pred_fallthru
      _
    // Predicated region
    $region14: #{tpu_custom_call.1} parent=1 // pred_check
      _
    $region15: #{tpu_custom_call.1} parent=1 // pred_check_branch
      %58 = sbr.rel (0) target = $region17
    $region16: #{tpu_custom_call.1} parent=1 // pred_region
      %60 = dma.done [#allocation6], 32
    $region17: #{tpu_custom_call.1} parent=1 // pred_fallthru
      _
    %61 = vsyncpa [#allocation5], 1
    %62 = vsyncpa [#allocation6], 1

</llo_original>
